<compile_context>
chip_gen: v7x
topology: tpu7x:2x2x1
jax: 0.10.0
libtpu: 0.0.40
codegen_flags: <defaults>
</compile_context>

<pallas_src>
import jax
import jax.numpy as jnp
from jax.experimental import pallas as pl
from jax.experimental.pallas import tpu as pltpu

# --- synthetic "util" constants (small shapes) -------------------------------
OBS_DIMENSION = 8          # state input = 2 * OBS_DIMENSION = 16
ACTION_DIMENSION = 2       # action input = 2 * ACTION_DIMENSION = 4
HIDDEN_L1_CRITIC = 64
HIDDEN_L2_CRITIC = 32
BN_EPS = 1e-5

S_IN = 2 * OBS_DIMENSION       # 16
A_IN = 2 * ACTION_DIMENSION    # 4
H1 = HIDDEN_L1_CRITIC          # 64
H2 = HIDDEN_L2_CRITIC          # 32
OUT_LANES = 128                # lane-dense padded output width (full vst, no vst.msk)


def critic_kernel(state_ref, action_ref,
                  w1t_ref, b1_ref,
                  gamma_ref, beta_ref,
                  w2at_ref, w2bt_ref, b2_ref,
                  w3_ref, b3_ref,
                  out_ref,
                  h1_cache, sum_ref, ssd_ref, mean_ref, scale_ref, shift_ref):
    p = pl.program_id(0)   # phase: 0 = fc1+sum, 1 = centered var, 2 = normalize+fc2+fc3
    t = pl.program_id(1)   # batch tile
    n_rows = h1_cache.shape[0] * h1_cache.shape[1]   # static: full batch size B
    inv_n = 1.0 / float(n_rows)

    @pl.when(p == 0)
    def _phase0():
        x = state_ref[...]                                            # (TB, S_IN)
        h1 = jnp.dot(x, w1t_ref[...],
                     preferred_element_type=jnp.float32) + b1_ref[...]
        h1 = jnp.maximum(h1, 0.0)                                     # (TB, H1)
        h1_cache[t] = h1                                              # cache for later phases

        @pl.when(t == 0)
        def _():
            sum_ref[...] = jnp.zeros_like(sum_ref)

        sum_ref[...] += jnp.sum(h1, axis=0, keepdims=True)

    @pl.when(p == 1)
    def _phase1():
        @pl.when(t == 0)
        def _():
            mean_ref[...] = sum_ref[...] * inv_n
            ssd_ref[...] = jnp.zeros_like(ssd_ref)

        d = h1_cache[t] - mean_ref[...]                               # two-pass (centered) variance
        ssd_ref[...] += jnp.sum(d * d, axis=0, keepdims=True)

    @pl.when(p == 2)
    def _phase2():
        @pl.when(t == 0)
        def _():
            var = ssd_ref[...] * inv_n                                # biased variance (PyTorch BN fwd)
            scale = jax.lax.rsqrt(var + BN_EPS) * gamma_ref[...]      # fused BN affine
            scale_ref[...] = scale
            shift_ref[...] = beta_ref[...] - mean_ref[...] * scale

        s = h1_cache[t] * scale_ref[...] + shift_ref[...]             # (TB, H1)

        # fc2 on concat([s, action]): MXU for the H1 part, 4-term VPU outer
        # product for the tiny K=4 action part (keeps the MXU / result FIFO free).
        h2 = jnp.dot(s, w2at_ref[...],
                     preferred_element_type=jnp.float32) + b2_ref[...]
        act = action_ref[...]                                         # (TB, A_IN)
        w2bt = w2bt_ref[...]                                          # (A_IN, H2)
        for k in range(w2bt.shape[0]):                                # static, A_IN = 4
            h2 = h2 + act[:, k:k + 1] * w2bt[k:k + 1, :]
        h2 = jnp.maximum(h2, 0.0)                                     # (TB, H2)

        # fc3 as a lane reduction (w3 passed as a (1, H2) row).
        q = jnp.sum(h2 * w3_ref[...], axis=-1, keepdims=True) + b3_ref[...]   # (TB, 1)

        # Lane-dense store: broadcast the Q column across the 128-lane block;
        # the wrapper slices column 0.
        out_ref[...] = jnp.broadcast_to(q, out_ref.shape)


def _pick_batch_tile(batch, max_tb=512):
    """Largest batch tile <= max_tb (multiple of 8 when tiling is needed)."""
    if batch <= max_tb:
        return batch
    cap = max_tb - (max_tb % 8)
    for tb in range(cap, 7, -8):
        if batch % tb == 0:
            return tb
    return batch  # no clean divisor: fall back to a single (large) tile


def critic_forward(state, action, params):
    if state.ndim == 1:            # mirror PyTorch's unsqueeze
        state = state[None, :]
    if action.ndim == 1:
        action = action[None, :]
    B = state.shape[0]
    TB = _pick_batch_tile(B)
    NT = B // TB
    assert NT * TB == B

    # h1 cache lives in VMEM for the whole grid; keep it well under the v7x
    # 64 MiB/TC budget (and the 32 MiB scoped default).
    assert B * H1 * 4 <= 16 * 1024 * 1024, "h1 VMEM cache too large for this batch"
    # TODO(synk): for very large B, drop the h1 cache and recompute fc1 per phase.

    const = lambda ph, tl: (0, 0)
    tile_p0 = lambda ph, tl: (jnp.where(ph == 0, tl, 0), 0)   # state used in phase 0 only
    tile_p2 = lambda ph, tl: (jnp.where(ph == 2, tl, 0), 0)   # action/out used in phase 2 only

    flops = 2 * B * (S_IN * H1 + H1 * H2 + A_IN * H2 + H2) + 10 * B * H1
    bytes_accessed = 4 * (B * (S_IN + A_IN + OUT_LANES)
                          + S_IN * H1 + 3 * H1 + H1 * H2 + A_IN * H2 + 2 * H2 + 2)

    out_padded = pl.pallas_call(
        critic_kernel,
        out_shape=jax.ShapeDtypeStruct((B, OUT_LANES), jnp.float32),
        grid_spec=pltpu.PrefetchScalarGridSpec(
            num_scalar_prefetch=0,
            grid=(3, NT),                       # (phase, batch tile); phase is outer
            in_specs=[
                pl.BlockSpec((TB, S_IN), tile_p0),    # state
                pl.BlockSpec((TB, A_IN), tile_p2),    # action
                pl.BlockSpec((S_IN, H1), const),      # W1^T (VMEM-resident)
                pl.BlockSpec((1, H1), const),         # b1
                pl.BlockSpec((1, H1), const),         # gamma
                pl.BlockSpec((1, H1), const),         # beta
                pl.BlockSpec((H1, H2), const),        # W2a^T
                pl.BlockSpec((A_IN, H2), const),      # W2b^T
                pl.BlockSpec((1, H2), const),         # b2
                pl.BlockSpec((1, H2), const),         # W3 row
                pl.BlockSpec((1, 1), const),          # b3
            ],
            out_specs=pl.BlockSpec((TB, OUT_LANES), tile_p2),
            scratch_shapes=[
                pltpu.VMEM((NT, TB, H1), jnp.float32),   # h1 cache slab
                pltpu.VMEM((1, H1), jnp.float32),        # batch sum
                pltpu.VMEM((1, H1), jnp.float32),        # centered sum of squares
                pltpu.VMEM((1, H1), jnp.float32),        # mean
                pltpu.VMEM((1, H1), jnp.float32),        # fused BN scale
                pltpu.VMEM((1, H1), jnp.float32),        # fused BN shift
            ],
        ),
        compiler_params=pltpu.CompilerParams(
            # Both axes sequential: BN stats are a cross-tile reduction through
            # shared VMEM scratch, so the batch axis cannot be megacore-parallel here.
            dimension_semantics=("arbitrary", "arbitrary"),
        ),
        cost_estimate=pl.CostEstimate(
            flops=int(flops),
            transcendentals=int(H1),
            bytes_accessed=int(bytes_accessed),
        ),
    )(state, action,
      params["w1t"], params["b1"],
      params["gamma"], params["beta"],
      params["w2at"], params["w2bt"], params["b2"],
      jnp.transpose(params["w3t"]), params["b3"])

    return out_padded[:, :1]


def init_params(key):
    """Deterministic init: xavier-normal weights, zero biases, BN gamma=1 beta=0."""
    k1, k2, k3 = jax.random.split(key, 3)

    def xavier(k, fan_in, fan_out):
        std = (2.0 / (fan_in + fan_out)) ** 0.5
        # PyTorch weight shape is (out, in); we store the transpose (in, out).
        return (jax.random.normal(k, (fan_out, fan_in), jnp.float32) * std).T

    params = {
        "w1t": xavier(k1, S_IN, H1),                       # (S_IN, H1)
        "b1": jnp.zeros((1, H1), jnp.float32),
        "gamma": jnp.ones((1, H1), jnp.float32),
        "beta": jnp.zeros((1, H1), jnp.float32),
        "b2": jnp.zeros((1, H2), jnp.float32),
        "w3t": xavier(k3, H2, 1),                          # (H2, 1)
        "b3": jnp.zeros((1, 1), jnp.float32),
    }
    # fc2 weight (H2, H1 + A_IN) split along its input dim into the H1 part
    # and the action part, each stored transposed.
    w2t_full = xavier(k2, H1 + A_IN, H2)                   # (H1 + A_IN, H2)
    params["w2at"] = w2t_full[:H1, :]                      # (H1, H2)
    params["w2bt"] = w2t_full[H1:, :]                      # (A_IN, H2)
    return params


def critic_reference(state, action, params):
    """Pure-JAX reference for correctness check (training-mode BatchNorm)."""
    h1 = jnp.maximum(state @ params["w1t"] + params["b1"], 0.0)
    mean = jnp.mean(h1, axis=0, keepdims=True)
    var = jnp.mean((h1 - mean) ** 2, axis=0, keepdims=True)
    s = (h1 - mean) / jnp.sqrt(var + BN_EPS) * params["gamma"] + params["beta"]
    x = jnp.concatenate([s, action], axis=1)
    w2t = jnp.concatenate([params["w2at"], params["w2bt"]], axis=0)
    h2 = jnp.maximum(x @ w2t + params["b2"], 0.0)
    return h2 @ params["w3t"] + params["b3"]


if __name__ == "__main__":
    key = jax.random.PRNGKey(0)
    kp, ks, ka = jax.random.split(key, 3)

    B = 8
    state = jax.random.normal(ks, (B, S_IN), jnp.float32)
    action = jax.random.normal(ka, (B, A_IN), jnp.float32)
    params = init_params(kp)

    q = critic_forward(state, action, params)
    q = jax.block_until_ready(q)

    q_ref = critic_reference(state, action, params)
    assert q.shape == (B, 1)
    assert jnp.allclose(q, q_ref, atol=1e-4, rtol=1e-4), "mismatch vs JAX reference"

    print("KERNEL_OK")
</pallas_src>

<mosaic_0001>
module attributes {stable_mosaic.version = 11 : i64} {
  func.func @critic_kernel(%arg0: i32, %arg1: i32, %arg2: memref<8x16xf32, #tpu.memory_space<vmem>>, %arg3: memref<8x4xf32, #tpu.memory_space<vmem>>, %arg4: memref<16x64xf32, #tpu.memory_space<vmem>>, %arg5: memref<1x64xf32, #tpu.memory_space<vmem>>, %arg6: memref<1x64xf32, #tpu.memory_space<vmem>>, %arg7: memref<1x64xf32, #tpu.memory_space<vmem>>, %arg8: memref<64x32xf32, #tpu.memory_space<vmem>>, %arg9: memref<4x32xf32, #tpu.memory_space<vmem>>, %arg10: memref<1x32xf32, #tpu.memory_space<vmem>>, %arg11: memref<1x32xf32, #tpu.memory_space<vmem>>, %arg12: memref<1x1xf32, #tpu.memory_space<vmem>>, %arg13: memref<8x128xf32, #tpu.memory_space<vmem>>, %arg14: memref<1x8x64xf32, #tpu.memory_space<vmem>>, %arg15: memref<1x64xf32, #tpu.memory_space<vmem>>, %arg16: memref<1x64xf32, #tpu.memory_space<vmem>>, %arg17: memref<1x64xf32, #tpu.memory_space<vmem>>, %arg18: memref<1x64xf32, #tpu.memory_space<vmem>>, %arg19: memref<1x64xf32, #tpu.memory_space<vmem>>) attributes {dimension_semantics = [#tpu.dimension_semantics<arbitrary>, #tpu.dimension_semantics<arbitrary>], iteration_bounds = array<i64: 3, 1>, scalar_prefetch = 0 : i64, scratch_operands = 6 : i64, tpu.core_type = #tpu.core_type<tc>, window_params = [{transform_indices = @transform_0, window_bounds = array<i64: 8, 16>}, {transform_indices = @transform_1, window_bounds = array<i64: 8, 4>}, {pipeline_mode = #tpu.pipeline_mode<synchronous>, transform_indices = @transform_2, window_bounds = array<i64: 16, 64>}, {pipeline_mode = #tpu.pipeline_mode<synchronous>, transform_indices = @transform_3, window_bounds = array<i64: 1, 64>}, {pipeline_mode = #tpu.pipeline_mode<synchronous>, transform_indices = @transform_4, window_bounds = array<i64: 1, 64>}, {pipeline_mode = #tpu.pipeline_mode<synchronous>, transform_indices = @transform_5, window_bounds = array<i64: 1, 64>}, {pipeline_mode = #tpu.pipeline_mode<synchronous>, transform_indices = @transform_6, window_bounds = array<i64: 64, 32>}, {pipeline_mode = #tpu.pipeline_mode<synchronous>, transform_indices = @transform_7, window_bounds = array<i64: 4, 32>}, {pipeline_mode = #tpu.pipeline_mode<synchronous>, transform_indices = @transform_8, window_bounds = array<i64: 1, 32>}, {pipeline_mode = #tpu.pipeline_mode<synchronous>, transform_indices = @transform_9, window_bounds = array<i64: 1, 32>}, {pipeline_mode = #tpu.pipeline_mode<synchronous>, transform_indices = @transform_10, window_bounds = array<i64: 1, 1>}, {transform_indices = @transform_11, window_bounds = array<i64: 8, 128>}]} {
    %c0_i32 = arith.constant 0 : i32
    %0 = arith.cmpi eq, %arg0, %c0_i32 : i32
    %1 = arith.extui %0 : i1 to i32
    %c0_i32_0 = arith.constant 0 : i32
    %2 = arith.cmpi ne, %1, %c0_i32_0 : i32
    scf.if %2 {
      %c0 = arith.constant 0 : index
      %c0_3 = arith.constant 0 : index
      %9 = vector.load %arg2[%c0, %c0_3] : memref<8x16xf32, #tpu.memory_space<vmem>>, vector<8x16xf32>
      %c0_4 = arith.constant 0 : index
      %c0_5 = arith.constant 0 : index
      %10 = vector.load %arg4[%c0_4, %c0_5] : memref<16x64xf32, #tpu.memory_space<vmem>>, vector<16x64xf32>
      %cst = arith.constant dense<0.000000e+00> : vector<8x64xf32>
      %11 = tpu.matmul %9, %10, %cst {dimension_numbers = #tpu.dot_dimension_numbers<[1], [0], [0], [1], [0, 0, 1, 1], [], []>} : vector<8x16xf32>, vector<16x64xf32>, vector<8x64xf32> -> vector<8x64xf32>
      %c0_6 = arith.constant 0 : index
      %c0_7 = arith.constant 0 : index
      %12 = vector.load %arg5[%c0_6, %c0_7] : memref<1x64xf32, #tpu.memory_space<vmem>>, vector<1x64xf32>
      %13 = vector.broadcast %12 : vector<1x64xf32> to vector<8x64xf32>
      %14 = arith.addf %11, %13 : vector<8x64xf32>
      %cst_8 = arith.constant 0.000000e+00 : f32
      %15 = vector.broadcast %cst_8 : f32 to vector<8x64xf32>
      %16 = arith.maximumf %14, %15 : vector<8x64xf32>
      %17 = arith.index_cast %arg1 : i32 to index
      %c0_9 = arith.constant 0 : index
      %c0_10 = arith.constant 0 : index
      %18 = vector.load %arg14[%17, %c0_9, %c0_10] : memref<1x8x64xf32, #tpu.memory_space<vmem>>, vector<1x8x64xf32>
      %19 = vector.shape_cast %18 : vector<1x8x64xf32> to vector<8x64xf32>
      %20 = vector.shape_cast %16 : vector<8x64xf32> to vector<1x8x64xf32>
      tpu.vector_store %arg14[%17, %c0_9, %c0_10], %20 {strides = array<i32>} : memref<1x8x64xf32, #tpu.memory_space<vmem>>, vector<1x8x64xf32>,
      %c0_i32_11 = arith.constant 0 : i32
      %21 = arith.cmpi eq, %arg1, %c0_i32_11 : i32
      %22 = arith.extui %21 : i1 to i32
      %c0_i32_12 = arith.constant 0 : i32
      %23 = arith.cmpi ne, %22, %c0_i32_12 : i32
      scf.if %23 {
        %cst_18 = arith.constant 0.000000e+00 : f32
        %29 = vector.broadcast %cst_18 : f32 to vector<1x64xf32>
        %c0_19 = arith.constant 0 : index
        %c0_20 = arith.constant 0 : index
        %30 = vector.load %arg15[%c0_19, %c0_20] : memref<1x64xf32, #tpu.memory_space<vmem>>, vector<1x64xf32>
        tpu.vector_store %arg15[%c0_19, %c0_20], %29 {strides = array<i32>} : memref<1x64xf32, #tpu.memory_space<vmem>>, vector<1x64xf32>,
      } else {
      }
      %c0_13 = arith.constant 0 : index
      %c0_14 = arith.constant 0 : index
      %24 = vector.load %arg15[%c0_13, %c0_14] : memref<1x64xf32, #tpu.memory_space<vmem>>, vector<1x64xf32>
      %cst_15 = arith.constant dense<0.000000e+00> : vector<64xf32>
      %25 = vector.multi_reduction <add>, %16, %cst_15 [0] : vector<8x64xf32> to vector<64xf32>
      %26 = vector.shape_cast %25 : vector<64xf32> to vector<1x64xf32>
      %27 = arith.addf %24, %26 : vector<1x64xf32>
      %c0_16 = arith.constant 0 : index
      %c0_17 = arith.constant 0 : index
      %28 = vector.load %arg15[%c0_16, %c0_17] : memref<1x64xf32, #tpu.memory_space<vmem>>, vector<1x64xf32>
      tpu.vector_store %arg15[%c0_16, %c0_17], %27 {strides = array<i32>} : memref<1x64xf32, #tpu.memory_space<vmem>>, vector<1x64xf32>,
    } else {
    }
    %c1_i32 = arith.constant 1 : i32
    %3 = arith.cmpi eq, %arg0, %c1_i32 : i32
    %4 = arith.extui %3 : i1 to i32
    %c0_i32_1 = arith.constant 0 : i32
    %5 = arith.cmpi ne, %4, %c0_i32_1 : i32
    scf.if %5 {
      %c0_i32_3 = arith.constant 0 : i32
      %9 = arith.cmpi eq, %arg1, %c0_i32_3 : i32
      %10 = arith.extui %9 : i1 to i32
      %c0_i32_4 = arith.constant 0 : i32
      %11 = arith.cmpi ne, %10, %c0_i32_4 : i32
      scf.if %11 {
        %c0_12 = arith.constant 0 : index
        %c0_13 = arith.constant 0 : index
        %24 = vector.load %arg15[%c0_12, %c0_13] : memref<1x64xf32, #tpu.memory_space<vmem>>, vector<1x64xf32>
        %cst_14 = arith.constant 1.250000e-01 : f32
        %25 = vector.broadcast %cst_14 : f32 to vector<1x64xf32>
        %26 = arith.mulf %24, %25 : vector<1x64xf32>
        %c0_15 = arith.constant 0 : index
        %c0_16 = arith.constant 0 : index
        %27 = vector.load %arg17[%c0_15, %c0_16] : memref<1x64xf32, #tpu.memory_space<vmem>>, vector<1x64xf32>
        tpu.vector_store %arg17[%c0_15, %c0_16], %26 {strides = array<i32>} : memref<1x64xf32, #tpu.memory_space<vmem>>, vector<1x64xf32>,
        %cst_17 = arith.constant 0.000000e+00 : f32
        %28 = vector.broadcast %cst_17 : f32 to vector<1x64xf32>
        %c0_18 = arith.constant 0 : index
        %c0_19 = arith.constant 0 : index
        %29 = vector.load %arg16[%c0_18, %c0_19] : memref<1x64xf32, #tpu.memory_space<vmem>>, vector<1x64xf32>
        tpu.vector_store %arg16[%c0_18, %c0_19], %28 {strides = array<i32>} : memref<1x64xf32, #tpu.memory_space<vmem>>, vector<1x64xf32>,
      } else {
      }
      %12 = arith.index_cast %arg1 : i32 to index
      %c0 = arith.constant 0 : index
      %c0_5 = arith.constant 0 : index
      %13 = vector.load %arg14[%12, %c0, %c0_5] : memref<1x8x64xf32, #tpu.memory_space<vmem>>, vector<1x8x64xf32>
      %14 = vector.shape_cast %13 : vector<1x8x64xf32> to vector<8x64xf32>
      %c0_6 = arith.constant 0 : index
      %c0_7 = arith.constant 0 : index
      %15 = vector.load %arg17[%c0_6, %c0_7] : memref<1x64xf32, #tpu.memory_space<vmem>>, vector<1x64xf32>
      %16 = vector.broadcast %15 : vector<1x64xf32> to vector<8x64xf32>
      %17 = arith.subf %14, %16 : vector<8x64xf32>
      %c0_8 = arith.constant 0 : index
      %c0_9 = arith.constant 0 : index
      %18 = vector.load %arg16[%c0_8, %c0_9] : memref<1x64xf32, #tpu.memory_space<vmem>>, vector<1x64xf32>
      %19 = arith.mulf %17, %17 : vector<8x64xf32>
      %cst = arith.constant dense<0.000000e+00> : vector<64xf32>
      %20 = vector.multi_reduction <add>, %19, %cst [0] : vector<8x64xf32> to vector<64xf32>
      %21 = vector.shape_cast %20 : vector<64xf32> to vector<1x64xf32>
      %22 = arith.addf %18, %21 : vector<1x64xf32>
      %c0_10 = arith.constant 0 : index
      %c0_11 = arith.constant 0 : index
      %23 = vector.load %arg16[%c0_10, %c0_11] : memref<1x64xf32, #tpu.memory_space<vmem>>, vector<1x64xf32>
      tpu.vector_store %arg16[%c0_10, %c0_11], %22 {strides = array<i32>} : memref<1x64xf32, #tpu.memory_space<vmem>>, vector<1x64xf32>,
    } else {
    }
    %c2_i32 = arith.constant 2 : i32
    %6 = arith.cmpi eq, %arg0, %c2_i32 : i32
    %7 = arith.extui %6 : i1 to i32
    %c0_i32_2 = arith.constant 0 : i32
    %8 = arith.cmpi ne, %7, %c0_i32_2 : i32
    scf.if %8 {
      %c0_i32_3 = arith.constant 0 : i32
      %9 = arith.cmpi eq, %arg1, %c0_i32_3 : i32
      %10 = arith.extui %9 : i1 to i32
      %c0_i32_4 = arith.constant 0 : i32
      %11 = arith.cmpi ne, %10, %c0_i32_4 : i32
      scf.if %11 {
        %c0_26 = arith.constant 0 : index
        %c0_27 = arith.constant 0 : index
        %65 = vector.load %arg16[%c0_26, %c0_27] : memref<1x64xf32, #tpu.memory_space<vmem>>, vector<1x64xf32>
        %cst_28 = arith.constant 1.250000e-01 : f32
        %66 = vector.broadcast %cst_28 : f32 to vector<1x64xf32>
        %67 = arith.mulf %65, %66 : vector<1x64xf32>
        %cst_29 = arith.constant 9.99999974E-6 : f32
        %68 = vector.broadcast %cst_29 : f32 to vector<1x64xf32>
        %69 = arith.addf %67, %68 : vector<1x64xf32>
        %70 = math.rsqrt %69 : vector<1x64xf32>
        %c0_30 = arith.constant 0 : index
        %c0_31 = arith.constant 0 : index
        %71 = vector.load %arg6[%c0_30, %c0_31] : memref<1x64xf32, #tpu.memory_space<vmem>>, vector<1x64xf32>
        %72 = arith.mulf %70, %71 : vector<1x64xf32>
        %c0_32 = arith.constant 0 : index
        %c0_33 = arith.constant 0 : index
        %73 = vector.load %arg18[%c0_32, %c0_33] : memref<1x64xf32, #tpu.memory_space<vmem>>, vector<1x64xf32>
        tpu.vector_store %arg18[%c0_32, %c0_33], %72 {strides = array<i32>} : memref<1x64xf32, #tpu.memory_space<vmem>>, vector<1x64xf32>,
        %c0_34 = arith.constant 0 : index
        %c0_35 = arith.constant 0 : index
        %74 = vector.load %arg7[%c0_34, %c0_35] : memref<1x64xf32, #tpu.memory_space<vmem>>, vector<1x64xf32>
        %c0_36 = arith.constant 0 : index
        %c0_37 = arith.constant 0 : index
        %75 = vector.load %arg17[%c0_36, %c0_37] : memref<1x64xf32, #tpu.memory_space<vmem>>, vector<1x64xf32>
        %76 = arith.mulf %75, %72 : vector<1x64xf32>
        %77 = arith.subf %74, %76 : vector<1x64xf32>
        %c0_38 = arith.constant 0 : index
        %c0_39 = arith.constant 0 : index
        %78 = vector.load %arg19[%c0_38, %c0_39] : memref<1x64xf32, #tpu.memory_space<vmem>>, vector<1x64xf32>
        tpu.vector_store %arg19[%c0_38, %c0_39], %77 {strides = array<i32>} : memref<1x64xf32, #tpu.memory_space<vmem>>, vector<1x64xf32>,
      } else {
      }
      %12 = arith.index_cast %arg1 : i32 to index
      %c0 = arith.constant 0 : index
      %c0_5 = arith.constant 0 : index
      %13 = vector.load %arg14[%12, %c0, %c0_5] : memref<1x8x64xf32, #tpu.memory_space<vmem>>, vector<1x8x64xf32>
      %14 = vector.shape_cast %13 : vector<1x8x64xf32> to vector<8x64xf32>
      %c0_6 = arith.constant 0 : index
      %c0_7 = arith.constant 0 : index
      %15 = vector.load %arg18[%c0_6, %c0_7] : memref<1x64xf32, #tpu.memory_space<vmem>>, vector<1x64xf32>
      %16 = vector.broadcast %15 : vector<1x64xf32> to vector<8x64xf32>
      %17 = arith.mulf %14, %16 : vector<8x64xf32>
      %c0_8 = arith.constant 0 : index
      %c0_9 = arith.constant 0 : index
      %18 = vector.load %arg19[%c0_8, %c0_9] : memref<1x64xf32, #tpu.memory_space<vmem>>, vector<1x64xf32>
      %19 = vector.broadcast %18 : vector<1x64xf32> to vector<8x64xf32>
      %20 = arith.addf %17, %19 : vector<8x64xf32>
      %c0_10 = arith.constant 0 : index
      %c0_11 = arith.constant 0 : index
      %21 = vector.load %arg8[%c0_10, %c0_11] : memref<64x32xf32, #tpu.memory_space<vmem>>, vector<64x32xf32>
      %cst = arith.constant dense<0.000000e+00> : vector<8x32xf32>
      %22 = tpu.matmul %20, %21, %cst {dimension_numbers = #tpu.dot_dimension_numbers<[1], [0], [0], [1], [0, 0, 1, 1], [], []>} : vector<8x64xf32>, vector<64x32xf32>, vector<8x32xf32> -> vector<8x32xf32>
      %c0_12 = arith.constant 0 : index
      %c0_13 = arith.constant 0 : index
      %23 = vector.load %arg10[%c0_12, %c0_13] : memref<1x32xf32, #tpu.memory_space<vmem>>, vector<1x32xf32>
      %24 = vector.broadcast %23 : vector<1x32xf32> to vector<8x32xf32>
      %25 = arith.addf %22, %24 : vector<8x32xf32>
      %c0_14 = arith.constant 0 : index
      %c0_15 = arith.constant 0 : index
      %26 = vector.load %arg3[%c0_14, %c0_15] : memref<8x4xf32, #tpu.memory_space<vmem>>, vector<8x4xf32>
      %c0_16 = arith.constant 0 : index
      %c0_17 = arith.constant 0 : index
      %27 = vector.load %arg9[%c0_16, %c0_17] : memref<4x32xf32, #tpu.memory_space<vmem>>, vector<4x32xf32>
      %28 = vector.extract_strided_slice %26 {offsets = [0, 0], sizes = [8, 1], strides = [1, 1]} : vector<8x4xf32> to vector<8x1xf32>
      %29 = vector.extract_strided_slice %27 {offsets = [0, 0], sizes = [1, 32], strides = [1, 1]} : vector<4x32xf32> to vector<1x32xf32>
      %30 = vector.broadcast %28 : vector<8x1xf32> to vector<8x32xf32>
      %31 = vector.broadcast %29 : vector<1x32xf32> to vector<8x32xf32>
      %32 = arith.mulf %30, %31 : vector<8x32xf32>
      %33 = arith.addf %25, %32 : vector<8x32xf32>
      %34 = vector.extract_strided_slice %26 {offsets = [0, 1], sizes = [8, 1], strides = [1, 1]} : vector<8x4xf32> to vector<8x1xf32>
      %35 = vector.extract_strided_slice %27 {offsets = [1, 0], sizes = [1, 32], strides = [1, 1]} : vector<4x32xf32> to vector<1x32xf32>
      %36 = vector.broadcast %34 : vector<8x1xf32> to vector<8x32xf32>
      %37 = vector.broadcast %35 : vector<1x32xf32> to vector<8x32xf32>
      %38 = arith.mulf %36, %37 : vector<8x32xf32>
      %39 = arith.addf %33, %38 : vector<8x32xf32>
      %40 = vector.extract_strided_slice %26 {offsets = [0, 2], sizes = [8, 1], strides = [1, 1]} : vector<8x4xf32> to vector<8x1xf32>
      %41 = vector.extract_strided_slice %27 {offsets = [2, 0], sizes = [1, 32], strides = [1, 1]} : vector<4x32xf32> to vector<1x32xf32>
      %42 = vector.broadcast %40 : vector<8x1xf32> to vector<8x32xf32>
      %43 = vector.broadcast %41 : vector<1x32xf32> to vector<8x32xf32>
      %44 = arith.mulf %42, %43 : vector<8x32xf32>
      %45 = arith.addf %39, %44 : vector<8x32xf32>
      %46 = vector.extract_strided_slice %26 {offsets = [0, 3], sizes = [8, 1], strides = [1, 1]} : vector<8x4xf32> to vector<8x1xf32>
      %47 = vector.extract_strided_slice %27 {offsets = [3, 0], sizes = [1, 32], strides = [1, 1]} : vector<4x32xf32> to vector<1x32xf32>
      %48 = vector.broadcast %46 : vector<8x1xf32> to vector<8x32xf32>
      %49 = vector.broadcast %47 : vector<1x32xf32> to vector<8x32xf32>
      %50 = arith.mulf %48, %49 : vector<8x32xf32>
      %51 = arith.addf %45, %50 : vector<8x32xf32>
      %cst_18 = arith.constant 0.000000e+00 : f32
      %52 = vector.broadcast %cst_18 : f32 to vector<8x32xf32>
      %53 = arith.maximumf %51, %52 : vector<8x32xf32>
      %c0_19 = arith.constant 0 : index
      %c0_20 = arith.constant 0 : index
      %54 = vector.load %arg11[%c0_19, %c0_20] : memref<1x32xf32, #tpu.memory_space<vmem>>, vector<1x32xf32>
      %55 = vector.broadcast %54 : vector<1x32xf32> to vector<8x32xf32>
      %56 = arith.mulf %53, %55 : vector<8x32xf32>
      %cst_21 = arith.constant dense<0.000000e+00> : vector<8xf32>
      %57 = vector.multi_reduction <add>, %56, %cst_21 [1] : vector<8x32xf32> to vector<8xf32>
      %58 = vector.shape_cast %57 : vector<8xf32> to vector<8x1xf32>
      %c0_22 = arith.constant 0 : index
      %c0_23 = arith.constant 0 : index
      %59 = vector.load %arg12[%c0_22, %c0_23] : memref<1x1xf32, #tpu.memory_space<vmem>>, vector<1x1xf32>
      %60 = vector.broadcast %59 : vector<1x1xf32> to vector<8x1xf32>
      %61 = arith.addf %58, %60 : vector<8x1xf32>
      %62 = vector.shape_cast %61 : vector<8x1xf32> to vector<8x1xf32>
      %63 = vector.broadcast %62 : vector<8x1xf32> to vector<8x128xf32>
      %c0_24 = arith.constant 0 : index
      %c0_25 = arith.constant 0 : index
      %64 = vector.load %arg13[%c0_24, %c0_25] : memref<8x128xf32, #tpu.memory_space<vmem>>, vector<8x128xf32>
      tpu.vector_store %arg13[%c0_24, %c0_25], %63 {strides = array<i32>} : memref<8x128xf32, #tpu.memory_space<vmem>>, vector<8x128xf32>,
    } else {
    }
    return
  }
  func.func @transform_0(%arg0: i32, %arg1: i32) -> (i32, i32) {
    %c0_i32 = arith.constant 0 : i32
    %0 = arith.cmpi eq, %arg0, %c0_i32 : i32
    %c0_i32_0 = arith.constant 0 : i32
    %1 = arith.select %0, %arg1, %c0_i32_0 : i32
    %c0_i32_1 = arith.constant 0 : i32
    %c0_i32_2 = arith.constant 0 : i32
    return %1, %c0_i32_1 : i32, i32
  }
  func.func @transform_1(%arg0: i32, %arg1: i32) -> (i32, i32) {
    %c2_i32 = arith.constant 2 : i32
    %0 = arith.cmpi eq, %arg0, %c2_i32 : i32
    %c0_i32 = arith.constant 0 : i32
    %1 = arith.select %0, %arg1, %c0_i32 : i32
    %c0_i32_0 = arith.constant 0 : i32
    %c0_i32_1 = arith.constant 0 : i32
    return %1, %c0_i32_0 : i32, i32
  }
  func.func @transform_2(%arg0: i32, %arg1: i32) -> (i32, i32) {
    %c0_i32 = arith.constant 0 : i32
    %c0_i32_0 = arith.constant 0 : i32
    %c0_i32_1 = arith.constant 0 : i32
    return %c0_i32, %c0_i32_0 : i32, i32
  }
  func.func @transform_3(%arg0: i32, %arg1: i32) -> (i32, i32) {
    %c0_i32 = arith.constant 0 : i32
    %c0_i32_0 = arith.constant 0 : i32
    %c0_i32_1 = arith.constant 0 : i32
    return %c0_i32, %c0_i32_0 : i32, i32
  }
  func.func @transform_4(%arg0: i32, %arg1: i32) -> (i32, i32) {
    %c0_i32 = arith.constant 0 : i32
    %c0_i32_0 = arith.constant 0 : i32
    %c0_i32_1 = arith.constant 0 : i32
    return %c0_i32, %c0_i32_0 : i32, i32
  }
  func.func @transform_5(%arg0: i32, %arg1: i32) -> (i32, i32) {
    %c0_i32 = arith.constant 0 : i32
    %c0_i32_0 = arith.constant 0 : i32
    %c0_i32_1 = arith.constant 0 : i32
    return %c0_i32, %c0_i32_0 : i32, i32
  }
  func.func @transform_6(%arg0: i32, %arg1: i32) -> (i32, i32) {
    %c0_i32 = arith.constant 0 : i32
    %c0_i32_0 = arith.constant 0 : i32
    %c0_i32_1 = arith.constant 0 : i32
    return %c0_i32, %c0_i32_0 : i32, i32
  }
  func.func @transform_7(%arg0: i32, %arg1: i32) -> (i32, i32) {
    %c0_i32 = arith.constant 0 : i32
    %c0_i32_0 = arith.constant 0 : i32
    %c0_i32_1 = arith.constant 0 : i32
    return %c0_i32, %c0_i32_0 : i32, i32
  }
  func.func @transform_8(%arg0: i32, %arg1: i32) -> (i32, i32) {
    %c0_i32 = arith.constant 0 : i32
    %c0_i32_0 = arith.constant 0 : i32
    %c0_i32_1 = arith.constant 0 : i32
    return %c0_i32, %c0_i32_0 : i32, i32
  }
  func.func @transform_9(%arg0: i32, %arg1: i32) -> (i32, i32) {
    %c0_i32 = arith.constant 0 : i32
    %c0_i32_0 = arith.constant 0 : i32
    %c0_i32_1 = arith.constant 0 : i32
    return %c0_i32, %c0_i32_0 : i32, i32
  }
  func.func @transform_10(%arg0: i32, %arg1: i32) -> (i32, i32) {
    %c0_i32 = arith.constant 0 : i32
    %c0_i32_0 = arith.constant 0 : i32
    %c0_i32_1 = arith.constant 0 : i32
    return %c0_i32, %c0_i32_0 : i32, i32
  }
  func.func @transform_11(%arg0: i32, %arg1: i32) -> (i32, i32) {
    %c2_i32 = arith.constant 2 : i32
    %0 = arith.cmpi eq, %arg0, %c2_i32 : i32
    %c0_i32 = arith.constant 0 : i32
    %1 = arith.select %0, %arg1, %c0_i32 : i32
    %c0_i32_0 = arith.constant 0 : i32
    %c0_i32_1 = arith.constant 0 : i32
    return %1, %c0_i32_0 : i32, i32
  }
}

</mosaic_0001>

<llo_original>
// kernel: tpu_custom_call.1
$region0: #{tpu_custom_call.1}
  #allocation0 [shape = 'u32[]', space=smem, size = 0x4, offset = 0x4, fixed_abs, tag = 'smem constant byte address 0x4 - core index']
  #allocation1 [shape = 'u32[144,128]{1,0:T(1,128)}', space=vmem, size = 0x12000, scoped, tag = 'internal scratch']
  #allocation2 [shape = 'f32[1,8,64]{2,1,0:T(8,128)}', space=vmem, size = 0x1000, scoped, tag = 'scratch operand']
  #allocation3 [shape = 'f32[1,64]{1,0:T(1,128)}', space=vmem, size = 0x200, scoped, tag = 'scratch operand']
  #allocation4 [shape = 'f32[1,64]{1,0:T(1,128)}', space=vmem, size = 0x200, scoped, tag = 'scratch operand']
  #allocation5 [shape = 'f32[1,64]{1,0:T(1,128)}', space=vmem, size = 0x200, scoped, tag = 'scratch operand']
  #allocation6 [shape = 'f32[1,64]{1,0:T(1,128)}', space=vmem, size = 0x200, scoped, tag = 'scratch operand']
  #allocation7 [shape = 'f32[1,64]{1,0:T(1,128)}', space=vmem, size = 0x200, scoped, tag = 'scratch operand']
  #allocation8 [shape = 'f32[1,1]{1,0:T(1,128)S(1)}', space=vmem, size = 0x200, scoped, tag = 'scoped memory for tpu_custom_call.1']
  %s0 = inlined_call_operand.vmem [shape: f32[8,16], index: 0, kind: input, shape index: {}]
  %s1 = inlined_call_operand.vmem [shape: f32[8,4], index: 1, kind: input, shape index: {}]
  %s2 = inlined_call_operand.vmem [shape: f32[16,64], index: 2, kind: input, shape index: {}]
  %s3 = inlined_call_operand.vmem [shape: f32[1,64], index: 3, kind: input, shape index: {}]
  %s4 = inlined_call_operand.vmem [shape: f32[1,64], index: 4, kind: input, shape index: {}]
  %s5 = inlined_call_operand.vmem [shape: f32[1,64], index: 5, kind: input, shape index: {}]
  %s6 = inlined_call_operand.vmem [shape: f32[64,32], index: 6, kind: input, shape index: {}]
  %s7 = inlined_call_operand.vmem [shape: f32[4,32], index: 7, kind: input, shape index: {}]
  %s8 = inlined_call_operand.vmem [shape: f32[1,32], index: 8, kind: input, shape index: {}]
  %s9 = inlined_call_operand.vmem [shape: f32[1,32], index: 9, kind: input, shape index: {}]
  %s10 = inlined_call_operand.<no memory space> [shape: f32[1,1], index: 10, kind: input, shape index: {}]
  %s11 = inlined_call_operand.hbm [shape: f32[8,128], index: 11, kind: output, shape index: {}]
  %s12 = sld [smem:[#allocation0]]
  $region101: #{tpu_custom_call.1} parent=0
    _
  %s14 = ssub.s32 1, %s12
  %s15 = scalar_select 0, %s14, %s12
  %v16 = vstv %s10
  %17 = vst [vmem:[#allocation8] sm:$0x1] %v16
  $region1: #{tpu_custom_call.1} parent=0
    #allocation9 [shape = 'u8[8192]{0}', space=vmem, size = 0x2000, scoped, tag = 'output window, operand 0']
    #allocation10 [shape = 's32[2]{0}', space=sflag, size = 0x8, scoped, tag = 'scoped memory for tpu_custom_call.1']
    %18 = vsyncpa [#allocation10], 0
    %s19 = scalar_lea.sflag [#allocation10], 1
    %20 = vsyncpa %s19, 0
    loop: start=0, step=1, limit=5
    $region2: #{tpu_custom_call.1} parent=1 // loop_pre_header
      _
    $region3: #{tpu_custom_call.1} parent=1 // loop_header
      %s22 = sphi 0, %s26
      %p23 = scmp.ge.s32.totalorder %s22, 5
      %s29 = sphi 0, %s41
      %s30 = sphi 0, %s37
      %s31 = sphi 0, %s29
      %s32 = sphi 0, %s30
      %s33 = sphi 0, %s31
      %s34 = sphi 0, %s32
      %s48 = sphi 0, %s50
      %s51 = sphi 0, %s48
      %s52 = sphi 0, %s51
      %s68 = sphi 0, %s52
      %s78 = sphi 0, %s80
      %s81 = sphi 0, %s78
      %s82 = sphi 0, %s81
      %s98 = sphi 0, %s82
      %s102 = sphi 0, %s102
      %s104 = sphi 0, %s102
      %s105 = sphi 0, %s104
      %s119 = sphi 0, %s105
      %s123 = sphi 0, %s123
      %s125 = sphi 0, %s123
      %s126 = sphi 0, %s125
      %s140 = sphi 0, %s126
      %s144 = sphi 0, %s144
      %s146 = sphi 0, %s144
      %s147 = sphi 0, %s146
      %s161 = sphi 0, %s147
      %s165 = sphi 0, %s165
      %s167 = sphi 0, %s165
      %s168 = sphi 0, %s167
      %s182 = sphi 0, %s168
      %s186 = sphi 0, %s186
      %s188 = sphi 0, %s186
      %s189 = sphi 0, %s188
      %s203 = sphi 0, %s189
      %s207 = sphi 0, %s207
      %s209 = sphi 0, %s207
      %s210 = sphi 0, %s209
      %s224 = sphi 0, %s210
      %s228 = sphi 0, %s228
      %s230 = sphi 0, %s228
      %s231 = sphi 0, %s230
      %s245 = sphi 0, %s231
      %s249 = sphi 0, %s249
      %s251 = sphi 0, %s249
      %s252 = sphi 0, %s251
      %s266 = sphi 0, %s252
      %s270 = sphi 0, %s270
      %s272 = sphi 0, %s270
      %s273 = sphi 0, %s272
      %s287 = sphi 0, %s273
      %s297 = sphi 0, %s299
      %s300 = sphi 0, %s297
      %s301 = sphi 0, %s300
      %s317 = sphi 0, %s301
    $region4: #{tpu_custom_call.1} parent=1 // loop_header_branch
      %25 = sbr.rel (%p23) target = $region8
    $region5: #{tpu_custom_call.1} parent=1 // loop_body
      %s27 = ssub.s32 %s22, 1
      %s28 = ssub.s32 %s22, 2
      %s35 = sadd.s32 1, %s30
      %p36 = scmp.ge.s32.totalorder %s35, 1
      %s37 = scalar_select %p36, 0, %s35
      %s38 = sadd.s32 1, %s29
      %s39 = scalar_select %p36, %s38, %s29
      %p40 = scmp.ge.s32.totalorder %s39, 3
      %s41 = scalar_select %p40, 0, %s39
      %p42 = scmp.eq.s32.totalorder %s29, 0
      %s43 = scalar_select %p42, %s30, 0
      %p44 = scmp.eq.s32.totalorder %s41, 0
      %s45 = scalar_select %p44, %s37, 0
      %s46 = ssub.s32 %s43, %s45
      %p47 = scmp.eq.s32.totalorder %s46, 0
      %s49 = sadd.s32 %s48, 1
      %s50 = scalar_select %p47, %s48, %s49
      %p53 = pneg %p47
      %p54 = scmp.eq.s32.totalorder %s22, 2
      %p55 = por %p53, %p54
      %p56 = scmp.ne.s32.totalorder %s48, %s51
      %p57 = scmp.eq.s32.totalorder %s22, 0
      %p58 = por %p56, %p57
      %p59 = scmp.ne.s32.totalorder %s48, %s51
      %p60 = scmp.eq.s32.totalorder %s27, 2
      %p61 = por %p59, %p60
      %p62 = scmp.ne.s32.totalorder %s51, %s52
      %p63 = scmp.eq.s32.totalorder %s27, 0
      %p64 = por %p62, %p63
      %p65 = scmp.ne.s32.totalorder %s51, %s52
      %p66 = scmp.eq.s32.totalorder %s28, 2
      %p67 = por %p65, %p66
      %p69 = scmp.ne.s32.totalorder %s52, %s68
      %p70 = scmp.eq.s32.totalorder %s28, 0
      %p71 = por %p69, %p70
      %p72 = scmp.eq.s32.totalorder %s29, 2
      %s73 = scalar_select %p72, %s30, 0
      %p74 = scmp.eq.s32.totalorder %s41, 2
      %s75 = scalar_select %p74, %s37, 0
      %s76 = ssub.s32 %s73, %s75
      %p77 = scmp.eq.s32.totalorder %s76, 0
      %s79 = sadd.s32 %s78, 1
      %s80 = scalar_select %p77, %s78, %s79
      %p83 = pneg %p77
      %p84 = scmp.eq.s32.totalorder %s22, 2
      %p85 = por %p83, %p84
      %p86 = scmp.ne.s32.totalorder %s78, %s81
      %p87 = scmp.eq.s32.totalorder %s22, 0
      %p88 = por %p86, %p87
      %p89 = scmp.ne.s32.totalorder %s78, %s81
      %p90 = scmp.eq.s32.totalorder %s27, 2
      %p91 = por %p89, %p90
      %p92 = scmp.ne.s32.totalorder %s81, %s82
      %p93 = scmp.eq.s32.totalorder %s27, 0
      %p94 = por %p92, %p93
      %p95 = scmp.ne.s32.totalorder %s81, %s82
      %p96 = scmp.eq.s32.totalorder %s28, 2
      %p97 = por %p95, %p96
      %p99 = scmp.ne.s32.totalorder %s82, %s98
      %p100 = scmp.eq.s32.totalorder %s28, 0
      %p101 = por %p99, %p100
      %s103 = sadd.s32 %s102, 1
      %p106 = scmp.eq.s32.totalorder %s22, 2
      %p107 = scmp.ne.s32.totalorder %s102, %s104
      %p108 = scmp.eq.s32.totalorder %s22, 0
      %p109 = por %p107, %p108
      %p110 = scmp.ne.s32.totalorder %s102, %s104
      %p111 = scmp.eq.s32.totalorder %s27, 2
      %p112 = por %p110, %p111
      %p113 = scmp.ne.s32.totalorder %s104, %s105
      %p114 = scmp.eq.s32.totalorder %s27, 0
      %p115 = por %p113, %p114
      %p116 = scmp.ne.s32.totalorder %s104, %s105
      %p117 = scmp.eq.s32.totalorder %s28, 2
      %p118 = por %p116, %p117
      %p120 = scmp.ne.s32.totalorder %s105, %s119
      %p121 = scmp.eq.s32.totalorder %s28, 0
      %p122 = por %p120, %p121
      %s124 = sadd.s32 %s123, 1
      %p127 = scmp.eq.s32.totalorder %s22, 2
      %p128 = scmp.ne.s32.totalorder %s123, %s125
      %p129 = scmp.eq.s32.totalorder %s22, 0
      %p130 = por %p128, %p129
      %p131 = scmp.ne.s32.totalorder %s123, %s125
      %p132 = scmp.eq.s32.totalorder %s27, 2
      %p133 = por %p131, %p132
      %p134 = scmp.ne.s32.totalorder %s125, %s126
      %p135 = scmp.eq.s32.totalorder %s27, 0
      %p136 = por %p134, %p135
      %p137 = scmp.ne.s32.totalorder %s125, %s126
      %p138 = scmp.eq.s32.totalorder %s28, 2
      %p139 = por %p137, %p138
      %p141 = scmp.ne.s32.totalorder %s126, %s140
      %p142 = scmp.eq.s32.totalorder %s28, 0
      %p143 = por %p141, %p142
      %s145 = sadd.s32 %s144, 1
      %p148 = scmp.eq.s32.totalorder %s22, 2
      %p149 = scmp.ne.s32.totalorder %s144, %s146
      %p150 = scmp.eq.s32.totalorder %s22, 0
      %p151 = por %p149, %p150
      %p152 = scmp.ne.s32.totalorder %s144, %s146
      %p153 = scmp.eq.s32.totalorder %s27, 2
      %p154 = por %p152, %p153
      %p155 = scmp.ne.s32.totalorder %s146, %s147
      %p156 = scmp.eq.s32.totalorder %s27, 0
      %p157 = por %p155, %p156
      %p158 = scmp.ne.s32.totalorder %s146, %s147
      %p159 = scmp.eq.s32.totalorder %s28, 2
      %p160 = por %p158, %p159
      %p162 = scmp.ne.s32.totalorder %s147, %s161
      %p163 = scmp.eq.s32.totalorder %s28, 0
      %p164 = por %p162, %p163
      %s166 = sadd.s32 %s165, 1
      %p169 = scmp.eq.s32.totalorder %s22, 2
      %p170 = scmp.ne.s32.totalorder %s165, %s167
      %p171 = scmp.eq.s32.totalorder %s22, 0
      %p172 = por %p170, %p171
      %p173 = scmp.ne.s32.totalorder %s165, %s167
      %p174 = scmp.eq.s32.totalorder %s27, 2
      %p175 = por %p173, %p174
      %p176 = scmp.ne.s32.totalorder %s167, %s168
      %p177 = scmp.eq.s32.totalorder %s27, 0
      %p178 = por %p176, %p177
      %p179 = scmp.ne.s32.totalorder %s167, %s168
      %p180 = scmp.eq.s32.totalorder %s28, 2
      %p181 = por %p179, %p180
      %p183 = scmp.ne.s32.totalorder %s168, %s182
      %p184 = scmp.eq.s32.totalorder %s28, 0
      %p185 = por %p183, %p184
      %s187 = sadd.s32 %s186, 1
      %p190 = scmp.eq.s32.totalorder %s22, 2
      %p191 = scmp.ne.s32.totalorder %s186, %s188
      %p192 = scmp.eq.s32.totalorder %s22, 0
      %p193 = por %p191, %p192
      %p194 = scmp.ne.s32.totalorder %s186, %s188
      %p195 = scmp.eq.s32.totalorder %s27, 2
      %p196 = por %p194, %p195
      %p197 = scmp.ne.s32.totalorder %s188, %s189
      %p198 = scmp.eq.s32.totalorder %s27, 0
      %p199 = por %p197, %p198
      %p200 = scmp.ne.s32.totalorder %s188, %s189
      %p201 = scmp.eq.s32.totalorder %s28, 2
      %p202 = por %p200, %p201
      %p204 = scmp.ne.s32.totalorder %s189, %s203
      %p205 = scmp.eq.s32.totalorder %s28, 0
      %p206 = por %p204, %p205
      %s208 = sadd.s32 %s207, 1
      %p211 = scmp.eq.s32.totalorder %s22, 2
      %p212 = scmp.ne.s32.totalorder %s207, %s209
      %p213 = scmp.eq.s32.totalorder %s22, 0
      %p214 = por %p212, %p213
      %p215 = scmp.ne.s32.totalorder %s207, %s209
      %p216 = scmp.eq.s32.totalorder %s27, 2
      %p217 = por %p215, %p216
      %p218 = scmp.ne.s32.totalorder %s209, %s210
      %p219 = scmp.eq.s32.totalorder %s27, 0
      %p220 = por %p218, %p219
      %p221 = scmp.ne.s32.totalorder %s209, %s210
      %p222 = scmp.eq.s32.totalorder %s28, 2
      %p223 = por %p221, %p222
      %p225 = scmp.ne.s32.totalorder %s210, %s224
      %p226 = scmp.eq.s32.totalorder %s28, 0
      %p227 = por %p225, %p226
      %s229 = sadd.s32 %s228, 1
      %p232 = scmp.eq.s32.totalorder %s22, 2
      %p233 = scmp.ne.s32.totalorder %s228, %s230
      %p234 = scmp.eq.s32.totalorder %s22, 0
      %p235 = por %p233, %p234
      %p236 = scmp.ne.s32.totalorder %s228, %s230
      %p237 = scmp.eq.s32.totalorder %s27, 2
      %p238 = por %p236, %p237
      %p239 = scmp.ne.s32.totalorder %s230, %s231
      %p240 = scmp.eq.s32.totalorder %s27, 0
      %p241 = por %p239, %p240
      %p242 = scmp.ne.s32.totalorder %s230, %s231
      %p243 = scmp.eq.s32.totalorder %s28, 2
      %p244 = por %p242, %p243
      %p246 = scmp.ne.s32.totalorder %s231, %s245
      %p247 = scmp.eq.s32.totalorder %s28, 0
      %p248 = por %p246, %p247
      %s250 = sadd.s32 %s249, 1
      %p253 = scmp.eq.s32.totalorder %s22, 2
      %p254 = scmp.ne.s32.totalorder %s249, %s251
      %p255 = scmp.eq.s32.totalorder %s22, 0
      %p256 = por %p254, %p255
      %p257 = scmp.ne.s32.totalorder %s249, %s251
      %p258 = scmp.eq.s32.totalorder %s27, 2
      %p259 = por %p257, %p258
      %p260 = scmp.ne.s32.totalorder %s251, %s252
      %p261 = scmp.eq.s32.totalorder %s27, 0
      %p262 = por %p260, %p261
      %p263 = scmp.ne.s32.totalorder %s251, %s252
      %p264 = scmp.eq.s32.totalorder %s28, 2
      %p265 = por %p263, %p264
      %p267 = scmp.ne.s32.totalorder %s252, %s266
      %p268 = scmp.eq.s32.totalorder %s28, 0
      %p269 = por %p267, %p268
      %s271 = sadd.s32 %s270, 1
      %p274 = scmp.eq.s32.totalorder %s22, 2
      %p275 = scmp.ne.s32.totalorder %s270, %s272
      %p276 = scmp.eq.s32.totalorder %s22, 0
      %p277 = por %p275, %p276
      %p278 = scmp.ne.s32.totalorder %s270, %s272
      %p279 = scmp.eq.s32.totalorder %s27, 2
      %p280 = por %p278, %p279
      %p281 = scmp.ne.s32.totalorder %s272, %s273
      %p282 = scmp.eq.s32.totalorder %s27, 0
      %p283 = por %p281, %p282
      %p284 = scmp.ne.s32.totalorder %s272, %s273
      %p285 = scmp.eq.s32.totalorder %s28, 2
      %p286 = por %p284, %p285
      %p288 = scmp.ne.s32.totalorder %s273, %s287
      %p289 = scmp.eq.s32.totalorder %s28, 0
      %p290 = por %p288, %p289
      %p291 = scmp.eq.s32.totalorder %s29, 2
      %s292 = scalar_select %p291, %s30, 0
      %p293 = scmp.eq.s32.totalorder %s41, 2
      %s294 = scalar_select %p293, %s37, 0
      %s295 = ssub.s32 %s292, %s294
      %p296 = scmp.eq.s32.totalorder %s295, 0
      %s298 = sadd.s32 %s297, 1
      %s299 = scalar_select %p296, %s297, %s298
      %p302 = pneg %p296
      %p303 = scmp.eq.s32.totalorder %s22, 2
      %p304 = por %p302, %p303
      %p305 = scmp.ne.s32.totalorder %s297, %s300
      %p306 = scmp.eq.s32.totalorder %s22, 0
      %p307 = por %p305, %p306
      %p308 = scmp.ne.s32.totalorder %s297, %s300
      %p309 = scmp.eq.s32.totalorder %s27, 2
      %p310 = por %p308, %p309
      %p311 = scmp.ne.s32.totalorder %s300, %s301
      %p312 = scmp.eq.s32.totalorder %s27, 0
      %p313 = por %p311, %p312
      %p314 = scmp.ne.s32.totalorder %s300, %s301
      %p315 = scmp.eq.s32.totalorder %s28, 2
      %p316 = por %p314, %p315
      %p318 = scmp.ne.s32.totalorder %s301, %s317
      %p319 = scmp.eq.s32.totalorder %s28, 0
      %p320 = por %p318, %p319
      %p321 = scmp.le.s32.totalorder 1, %s22
      %p322 = scmp.lt.s32.totalorder %s22, 4
      %p323 = pnand %p321, %p322
      %p324 = pneg %p323
      // Predicated region
      $region9: #{tpu_custom_call.1} parent=5 // pred_check
        _
      $region10: #{tpu_custom_call.1} parent=5 // pred_check_branch
        %326 = sbr.rel (%p323) target = $region12
      $region11: #{tpu_custom_call.1} parent=5 // pred_region
        %s327 = ssub.s32 %s22, 1
        // Predicated region
        $region13: #{tpu_custom_call.1} parent=11 // pred_check
          %p328 = pneg %p115
        $region14: #{tpu_custom_call.1} parent=11 // pred_check_branch
          %330 = sbr.rel (%p328) target = $region16
        $region15: #{tpu_custom_call.1} parent=11 // pred_region
          _
        $region16: #{tpu_custom_call.1} parent=11 // pred_fallthru
          _
        // Predicated region
        $region17: #{tpu_custom_call.1} parent=11 // pred_check
          %p331 = pneg %p136
        $region18: #{tpu_custom_call.1} parent=11 // pred_check_branch
          %333 = sbr.rel (%p331) target = $region20
        $region19: #{tpu_custom_call.1} parent=11 // pred_region
          _
        $region20: #{tpu_custom_call.1} parent=11 // pred_fallthru
          _
        // Predicated region
        $region21: #{tpu_custom_call.1} parent=11 // pred_check
          %p334 = pneg %p157
        $region22: #{tpu_custom_call.1} parent=11 // pred_check_branch
          %336 = sbr.rel (%p334) target = $region24
        $region23: #{tpu_custom_call.1} parent=11 // pred_region
          _
        $region24: #{tpu_custom_call.1} parent=11 // pred_fallthru
          _
        // Predicated region
        $region25: #{tpu_custom_call.1} parent=11 // pred_check
          %p337 = pneg %p178
        $region26: #{tpu_custom_call.1} parent=11 // pred_check_branch
          %339 = sbr.rel (%p337) target = $region28
        $region27: #{tpu_custom_call.1} parent=11 // pred_region
          _
        $region28: #{tpu_custom_call.1} parent=11 // pred_fallthru
          _
        // Predicated region
        $region29: #{tpu_custom_call.1} parent=11 // pred_check
          %p340 = pneg %p199
        $region30: #{tpu_custom_call.1} parent=11 // pred_check_branch
          %342 = sbr.rel (%p340) target = $region32
        $region31: #{tpu_custom_call.1} parent=11 // pred_region
          _
        $region32: #{tpu_custom_call.1} parent=11 // pred_fallthru
          _
        // Predicated region
        $region33: #{tpu_custom_call.1} parent=11 // pred_check
          %p343 = pneg %p220
        $region34: #{tpu_custom_call.1} parent=11 // pred_check_branch
          %345 = sbr.rel (%p343) target = $region36
        $region35: #{tpu_custom_call.1} parent=11 // pred_region
          _
        $region36: #{tpu_custom_call.1} parent=11 // pred_fallthru
          _
        // Predicated region
        $region37: #{tpu_custom_call.1} parent=11 // pred_check
          %p346 = pneg %p241
        $region38: #{tpu_custom_call.1} parent=11 // pred_check_branch
          %348 = sbr.rel (%p346) target = $region40
        $region39: #{tpu_custom_call.1} parent=11 // pred_region
          _
        $region40: #{tpu_custom_call.1} parent=11 // pred_fallthru
          _
        // Predicated region
        $region41: #{tpu_custom_call.1} parent=11 // pred_check
          %p349 = pneg %p262
        $region42: #{tpu_custom_call.1} parent=11 // pred_check_branch
          %351 = sbr.rel (%p349) target = $region44
        $region43: #{tpu_custom_call.1} parent=11 // pred_region
          _
        $region44: #{tpu_custom_call.1} parent=11 // pred_fallthru
          _
        // Predicated region
        $region45: #{tpu_custom_call.1} parent=11 // pred_check
          %p352 = pneg %p283
        $region46: #{tpu_custom_call.1} parent=11 // pred_check_branch
          %354 = sbr.rel (%p352) target = $region48
        $region47: #{tpu_custom_call.1} parent=11 // pred_region
          _
        $region48: #{tpu_custom_call.1} parent=11 // pred_fallthru
          _
      $region12: #{tpu_custom_call.1} parent=5 // pred_fallthru
        _
      %p355 = scmp.lt.s32.totalorder %s22, 3
      // Predicated region
      $region49: #{tpu_custom_call.1} parent=5 // pred_check
        %p356 = pneg %p355
      $region50: #{tpu_custom_call.1} parent=5 // pred_check_branch
        %358 = sbr.rel (%p356) target = $region52
      $region51: #{tpu_custom_call.1} parent=5 // pred_region
        // Predicated region
        $region53: #{tpu_custom_call.1} parent=51 // pred_check
          %p359 = pneg %p58
        $region54: #{tpu_custom_call.1} parent=51 // pred_check_branch
          %361 = sbr.rel (%p359) target = $region56
        $region55: #{tpu_custom_call.1} parent=51 // pred_region
          %p362 = scmp.eq.s32.totalorder %s29, 0
          %s363 = scalar_select %p362, %s30, 0
          %p364 = scmp.lt.s32.totalorder %s363, 0
          %s365 = scalar_select %p364, %s363, 0
          %s366 = smul.addr %s365, 8
          %s367 = scalar_lea.vmem %s0, %s366
          %p368 = scmp.eq.s32.totalorder %s29, 0
          %s369 = scalar_select %p368, %s30, 0
        $region56: #{tpu_custom_call.1} parent=51 // pred_fallthru
          _
        // Predicated region
        $region57: #{tpu_custom_call.1} parent=51 // pred_check
          %p370 = pneg %p88
        $region58: #{tpu_custom_call.1} parent=51 // pred_check_branch
          %372 = sbr.rel (%p370) target = $region60
        $region59: #{tpu_custom_call.1} parent=51 // pred_region
          %p373 = scmp.eq.s32.totalorder %s29, 2
          %s374 = scalar_select %p373, %s30, 0
          %p375 = scmp.lt.s32.totalorder %s374, 0
          %s376 = scalar_select %p375, %s374, 0
          %s377 = smul.addr %s376, 8
          %s378 = scalar_lea.vmem %s1, %s377
          %p379 = scmp.eq.s32.totalorder %s29, 2
          %s380 = scalar_select %p379, %s30, 0
        $region60: #{tpu_custom_call.1} parent=51 // pred_fallthru
          _
      $region52: #{tpu_custom_call.1} parent=5 // pred_fallthru
        _
      %p381 = scmp.le.s32.totalorder 1, %s22
      %p382 = scmp.lt.s32.totalorder %s22, 4
      %p383 = pnand %p381, %p382
      %p384 = pneg %p383
      // Predicated region
      $region61: #{tpu_custom_call.1} parent=5 // pred_check
        _
      $region62: #{tpu_custom_call.1} parent=5 // pred_check_branch
        %386 = sbr.rel (%p383) target = $region64
      $region63: #{tpu_custom_call.1} parent=5 // pred_region
        %s387 = ssub.s32 %s22, 1
        %p388 = scmp.eq.s32.totalorder %s31, 0
        %s389 = scalar_select %p388, %s32, 0
        %p390 = scmp.lt.s32.totalorder %s389, 0
        %s391 = scalar_select %p390, %s389, 0
        %s392 = smul.addr %s391, 8
        %s393 = scalar_lea.vmem %s0, %s392
        %p394 = pneg %p64
        %p395 = pneg %p61
        %p396 = scmp.eq.s32.totalorder %s31, 2
        %s397 = scalar_select %p396, %s32, 0
        %p398 = scmp.lt.s32.totalorder %s397, 0
        %s399 = scalar_select %p398, %s397, 0
        %s400 = smul.addr %s399, 8
        %s401 = scalar_lea.vmem %s1, %s400
        %p402 = pneg %p94
        %p403 = pneg %p91
        %p404 = pneg %p115
        %p405 = pneg %p112
        %p406 = pneg %p136
        %p407 = pneg %p133
        %p408 = pneg %p157
        %p409 = pneg %p154
        %p410 = pneg %p178
        %p411 = pneg %p175
        %p412 = pneg %p199
        %p413 = pneg %p196
        %p414 = pneg %p220
        %p415 = pneg %p217
        %p416 = pneg %p241
        %p417 = pneg %p238
        %p418 = pneg %p262
        %p419 = pneg %p259
        %p420 = pneg %p283
        %p421 = pneg %p280
        %p422 = pneg %p313
        %p423 = pneg %p310
        %s424 = sand.u32 %s300, 1
        %s425 = scalar_lea.sflag [#allocation10], %s424
        %s426 = sand.u32 %s300, 1
        %s427 = smul.addr %s426, 8
        %s428 = scalar_lea.vmem [#allocation9], %s427
        %p429 = scmp.eq.s32.totalorder %s31, 0
        %s430 = scalar_select %p429, %s32, 0
        %p431 = scmp.lt.s32.totalorder %s430, 0
        %s432 = scalar_select %p431, %s430, 0
        %s433 = smul.addr %s432, 8
        %s434 = scalar_lea.vmem %s0, %s433
        %p435 = scmp.eq.s32.totalorder %s31, 0
        %s436 = scalar_select %p435, %s32, 0
        %p437 = scmp.eq.s32.totalorder %s31, 2
        %s438 = scalar_select %p437, %s32, 0
        %p439 = scmp.lt.s32.totalorder %s438, 0
        %s440 = scalar_select %p439, %s438, 0
        %s441 = smul.addr %s440, 8
        %s442 = scalar_lea.vmem %s1, %s441
        %p443 = scmp.eq.s32.totalorder %s31, 2
        %s444 = scalar_select %p443, %s32, 0
        %p445 = scmp.eq.s32.totalorder %s31, 2
        %s446 = scalar_select %p445, %s32, 0
        %p447 = scmp.eq.s32.totalorder %s31, 0
        // Predicated region
        $region65: #{tpu_custom_call.1} parent=63 // pred_check
          %p448 = pneg %p447
        $region66: #{tpu_custom_call.1} parent=63 // pred_check_branch
          %450 = sbr.rel (%p448) target = $region68
        $region67: #{tpu_custom_call.1} parent=63 // pred_region
          %v451 = vld [vmem:[%s434] sm:$0xff]
          %v452 = vld [vmem:[%s2] sm:$0xff]
          %v453 = vld [vmem:[%s2 + $0x8] sm:$0xff]
          %v454 = vld [vmem:[%s3] sm:$0x1]
          %v456 = vlaneseq
          %v457 = vshrl.u32 %v456, 7
          %v458 = vsub.s32 0, %v457
          %v459 = vrot.slane %v454, %v458
          %vm461 = vcmask 130048
          %v463 = vsel %vm461, %v451, 0
          %465 = vmatprep.subr.mxu0 0.0
          %466 = vmatpush1.msra.mxu0 %v452
          %467 = vmatprep.subr.mxu0 0.0
          %468 = vmatpush1.msra.mxu0 %v453
          %469 = vmatprep.subr.mxu0 0.0
          %470 = vmatpush1.msra.mxu0 0.0
          %471 = vmatprep.subr.mxu0 0.0
          %472 = vmatpush1.msra.mxu0 0.0
          %473 = vmatprep.subr.mxu0 0.0
          %474 = vmatpush1.msra.mxu0 0.0
          %475 = vmatprep.subr.mxu0 0.0
          %476 = vmatpush1.msra.mxu0 0.0
          %477 = vmatprep.subr.mxu0 0.0
          %478 = vmatpush1.msra.mxu0 0.0
          %479 = vmatprep.subr.mxu0 0.0
          %480 = vmatpush1.msra.mxu0 0.0
          %481 = vmatprep.subr.mxu0 0.0
          %482 = vmatpush1.msra.mxu0 0.0
          %483 = vmatprep.subr.mxu0 0.0
          %484 = vmatpush1.msra.mxu0 0.0
          %485 = vmatprep.subr.mxu0 0.0
          %486 = vmatpush1.msra.mxu0 0.0
          %487 = vmatprep.subr.mxu0 0.0
          %488 = vmatpush1.msra.mxu0 0.0
          %489 = vmatprep.subr.mxu0 0.0
          %490 = vmatpush1.msra.mxu0 0.0
          %491 = vmatprep.subr.mxu0 0.0
          %492 = vmatpush1.msra.mxu0 0.0
          %493 = vmatprep.subr.mxu0 0.0
          %494 = vmatpush1.msra.mxu0 0.0
          %495 = vmatprep.subr.mxu0 0.0
          %496 = vmatpush1.msra.mxu0 0.0
          %497 = vmatprep.subr.mxu0 0.0
          %498 = vmatpush1.msra.mxu0 0.0
          %499 = vmatprep.subr.mxu0 0.0
          %500 = vmatpush1.msra.mxu0 0.0
          %501 = vmatprep.subr.mxu0 0.0
          %502 = vmatpush1.msra.mxu0 0.0
          %503 = vmatprep.subr.mxu0 0.0
          %504 = vmatpush1.msra.mxu0 0.0
          %505 = vmatprep.subr.mxu0 0.0
          %506 = vmatpush1.msra.mxu0 0.0
          %507 = vmatprep.subr.mxu0 0.0
          %508 = vmatpush1.msra.mxu0 0.0
          %509 = vmatprep.subr.mxu0 0.0
          %510 = vmatpush1.msra.mxu0 0.0
          %511 = vmatprep.subr.mxu0 0.0
          %512 = vmatpush1.msra.mxu0 0.0
          %513 = vmatprep.subr.mxu0 0.0
          %514 = vmatpush1.msra.mxu0 0.0
          %515 = vmatprep.subr.mxu0 0.0
          %516 = vmatpush1.msra.mxu0 0.0
          %517 = vmatprep.subr.mxu0 0.0
          %518 = vmatpush1.msra.mxu0 0.0
          %519 = vmatprep.subr.mxu0 0.0
          %520 = vmatpush1.msra.mxu0 0.0
          %521 = vmatprep.subr.mxu0 0.0
          %522 = vmatpush1.msra.mxu0 0.0
          %523 = vmatprep.subr.mxu0 0.0
          %524 = vmatpush1.msra.mxu0 0.0
          %525 = vmatprep.subr.mxu0 0.0
          %526 = vmatpush1.msra.mxu0 0.0
          %527 = vmatprep.subr.mxu0 0.0
          %528 = vmatpush1.msra.mxu0 0.0
          %529 = vmatprep.mubr.f32.mxu0 0.0
          %530 = vmatmul.mubr.f32.gmra.mrb[0].mxu0 %v463
          %v531 = vpop.f32.mrb[0].mxu0
          %v532 = vadd.f32 %v459, %v531
          %v533 = vpop.f32.mrb[0].mxu0
          %534 = vdwg.mxu0
          %v535 = vmax.f32 %v532, 0.0
          %s536 = smul.u32 %s32, 8
          %s537 = scalar_lea.vmem [#allocation2], %s536
          %vm538 = vcmask 523264
          %539 = vst.msk [vmem:[%s537] sm:$0xff] %vm538, %v535
          %p540 = scmp.eq.s32.totalorder %s32, 0
          // Predicated region
          $region69: #{tpu_custom_call.1} parent=67 // pred_check
            %p541 = pneg %p540
          $region70: #{tpu_custom_call.1} parent=67 // pred_check_branch
            %543 = sbr.rel (%p541) target = $region72
          $region71: #{tpu_custom_call.1} parent=67 // pred_region
            %vm544 = vcmask 516096
            %545 = vst.msk [vmem:[#allocation3] sm:$0x1] %vm544, 0.0
          $region72: #{tpu_custom_call.1} parent=67 // pred_fallthru
            _
          %v546 = vld [vmem:[#allocation3] sm:$0x1]
          %v547 = vsel %vm538, %v535, 0.0
          %v548 = vrot.slane %v547, 4
          %v549 = vadd.f32 %v547, %v548
          %v550 = vrot.slane %v549, 2
          %v551 = vadd.f32 %v549, %v550
          %v552 = vrot.slane %v551, 1
          %v553 = vadd.f32 %v551, %v552
          %v554 = vadd.f32 %v546, %v553
          %vm555 = vcmask 516096
          %556 = vst.msk [vmem:[#allocation3] sm:$0x1] %vm555, %v554
        $region68: #{tpu_custom_call.1} parent=63 // pred_fallthru
          _
        %p557 = scmp.eq.s32.totalorder %s31, 1
        // Predicated region
        $region73: #{tpu_custom_call.1} parent=63 // pred_check
          %p558 = pneg %p557
        $region74: #{tpu_custom_call.1} parent=63 // pred_check_branch
          %560 = sbr.rel (%p558) target = $region76
        $region75: #{tpu_custom_call.1} parent=63 // pred_region
          %p561 = scmp.eq.s32.totalorder %s32, 0
          // Predicated region
          $region77: #{tpu_custom_call.1} parent=75 // pred_check
            %p562 = pneg %p561
          $region78: #{tpu_custom_call.1} parent=75 // pred_check_branch
            %564 = sbr.rel (%p562) target = $region80
          $region79: #{tpu_custom_call.1} parent=75 // pred_region
            %v565 = vld [vmem:[#allocation3] sm:$0x1]
            %v566 = vmul.f32 %v565, 0.125
            %vm567 = vcmask 516096
            %568 = vst.msk [vmem:[#allocation5] sm:$0x1] %vm567, %v566
            %569 = vst.msk [vmem:[#allocation4] sm:$0x1] %vm567, 0.0
          $region80: #{tpu_custom_call.1} parent=75 // pred_fallthru
            _
          %s570 = smul.u32 %s32, 8
          %s571 = scalar_lea.vmem [#allocation2], %s570
          %v572 = vld [vmem:[%s571] sm:$0xff]
          %v573 = vld [vmem:[#allocation5] sm:$0x1]
          %v575 = vlaneseq
          %v576 = vshrl.u32 %v575, 7
          %v577 = vsub.s32 0, %v576
          %v578 = vrot.slane %v573, %v577
          %v580 = vsub.f32 %v572, %v578
          %v581 = vld [vmem:[#allocation4] sm:$0x1]
          %v582 = vmul.f32 %v580, %v580
          %vm583 = vcmask 523264
          %v584 = vsel %vm583, %v582, 0.0
          %v585 = vrot.slane %v584, 4
          %v586 = vadd.f32 %v584, %v585
          %v587 = vrot.slane %v586, 2
          %v588 = vadd.f32 %v586, %v587
          %v589 = vrot.slane %v588, 1
          %v590 = vadd.f32 %v588, %v589
          %v591 = vadd.f32 %v581, %v590
          %vm592 = vcmask 516096
          %593 = vst.msk [vmem:[#allocation4] sm:$0x1] %vm592, %v591
        $region76: #{tpu_custom_call.1} parent=63 // pred_fallthru
          _
        %p594 = scmp.eq.s32.totalorder %s31, 2
        // Predicated region
        $region81: #{tpu_custom_call.1} parent=63 // pred_check
          %p595 = pneg %p594
        $region82: #{tpu_custom_call.1} parent=63 // pred_check_branch
          %597 = sbr.rel (%p595) target = $region84
        $region83: #{tpu_custom_call.1} parent=63 // pred_region
          %p598 = scmp.eq.s32.totalorder %s32, 0
          // Predicated region
          $region85: #{tpu_custom_call.1} parent=83 // pred_check
            %p599 = pneg %p598
          $region86: #{tpu_custom_call.1} parent=83 // pred_check_branch
            %601 = sbr.rel (%p599) target = $region88
          $region87: #{tpu_custom_call.1} parent=83 // pred_region
            %v602 = vld [vmem:[#allocation4] sm:$0x1]
            %v603 = vmul.f32 %v602, 0.125
            %v604 = vadd.f32 %v603, 1e-05
            %v605 = vrsqrt.pop %v604
            %v606 = vld [vmem:[%s4] sm:$0x1]
            %v607 = vmul.f32 %v605, %v606
            %vm608 = vcmask 516096
            %609 = vst.msk [vmem:[#allocation6] sm:$0x1] %vm608, %v607
            %v610 = vld [vmem:[%s5] sm:$0x1]
            %v611 = vld [vmem:[#allocation5] sm:$0x1]
            %v612 = vmul.f32 %v611, %v607
            %v613 = vsub.f32 %v610, %v612
            %614 = vst.msk [vmem:[#allocation7] sm:$0x1] %vm608, %v613
          $region88: #{tpu_custom_call.1} parent=83 // pred_fallthru
            _
          %s615 = smul.u32 %s32, 8
          %s616 = scalar_lea.vmem [#allocation2], %s615
          %v617 = vld [vmem:[%s616] sm:$0xff]
          %v618 = vld [vmem:[#allocation6] sm:$0x1]
          %v620 = vlaneseq
          %v621 = vshrl.u32 %v620, 7
          %v622 = vsub.s32 0, %v621
          %v623 = vrot.slane %v618, %v622
          %v625 = vmul.f32 %v617, %v623
          %v626 = vld [vmem:[#allocation7] sm:$0x1]
          %v628 = vlaneseq
          %v629 = vshrl.u32 %v628, 7
          %v630 = vsub.s32 0, %v629
          %v631 = vrot.slane %v626, %v630
          %v633 = vadd.f32 %v625, %v631
          %v634 = vld [vmem:[%s6] sm:$0xff]
          %v635 = vld [vmem:[%s6 + $0x8] sm:$0xff]
          %v636 = vld [vmem:[%s6 + $0x10] sm:$0xff]
          %v637 = vld [vmem:[%s6 + $0x18] sm:$0xff]
          %v638 = vld [vmem:[%s6 + $0x20] sm:$0xff]
          %v639 = vld [vmem:[%s6 + $0x28] sm:$0xff]
          %v640 = vld [vmem:[%s6 + $0x30] sm:$0xff]
          %v641 = vld [vmem:[%s6 + $0x38] sm:$0xff]
          %v642 = vld [vmem:[%s8] sm:$0x1]
          %v644 = vlaneseq
          %v645 = vshrl.u32 %v644, 7
          %v646 = vsub.s32 0, %v645
          %v647 = vrot.slane %v642, %v646
          %vm649 = vcmask 523264
          %v651 = vsel %vm649, %v633, 0
          %653 = vmatprep.subr.mxu0 0.0
          %654 = vmatpush1.msra.mxu0 %v634
          %655 = vmatprep.subr.mxu0 0.0
          %656 = vmatpush1.msra.mxu0 %v635
          %657 = vmatprep.subr.mxu0 0.0
          %658 = vmatpush1.msra.mxu0 %v636
          %659 = vmatprep.subr.mxu0 0.0
          %660 = vmatpush1.msra.mxu0 %v637
          %661 = vmatprep.subr.mxu0 0.0
          %662 = vmatpush1.msra.mxu0 %v638
          %663 = vmatprep.subr.mxu0 0.0
          %664 = vmatpush1.msra.mxu0 %v639
          %665 = vmatprep.subr.mxu0 0.0
          %666 = vmatpush1.msra.mxu0 %v640
          %667 = vmatprep.subr.mxu0 0.0
          %668 = vmatpush1.msra.mxu0 %v641
          %669 = vmatprep.subr.mxu0 0.0
          %670 = vmatpush1.msra.mxu0 0.0
          %671 = vmatprep.subr.mxu0 0.0
          %672 = vmatpush1.msra.mxu0 0.0
          %673 = vmatprep.subr.mxu0 0.0
          %674 = vmatpush1.msra.mxu0 0.0
          %675 = vmatprep.subr.mxu0 0.0
          %676 = vmatpush1.msra.mxu0 0.0
          %677 = vmatprep.subr.mxu0 0.0
          %678 = vmatpush1.msra.mxu0 0.0
          %679 = vmatprep.subr.mxu0 0.0
          %680 = vmatpush1.msra.mxu0 0.0
          %681 = vmatprep.subr.mxu0 0.0
          %682 = vmatpush1.msra.mxu0 0.0
          %683 = vmatprep.subr.mxu0 0.0
          %684 = vmatpush1.msra.mxu0 0.0
          %685 = vmatprep.subr.mxu0 0.0
          %686 = vmatpush1.msra.mxu0 0.0
          %687 = vmatprep.subr.mxu0 0.0
          %688 = vmatpush1.msra.mxu0 0.0
          %689 = vmatprep.subr.mxu0 0.0
          %690 = vmatpush1.msra.mxu0 0.0
          %691 = vmatprep.subr.mxu0 0.0
          %692 = vmatpush1.msra.mxu0 0.0
          %693 = vmatprep.subr.mxu0 0.0
          %694 = vmatpush1.msra.mxu0 0.0
          %695 = vmatprep.subr.mxu0 0.0
          %696 = vmatpush1.msra.mxu0 0.0
          %697 = vmatprep.subr.mxu0 0.0
          %698 = vmatpush1.msra.mxu0 0.0
          %699 = vmatprep.subr.mxu0 0.0
          %700 = vmatpush1.msra.mxu0 0.0
          %701 = vmatprep.subr.mxu0 0.0
          %702 = vmatpush1.msra.mxu0 0.0
          %703 = vmatprep.subr.mxu0 0.0
          %704 = vmatpush1.msra.mxu0 0.0
          %705 = vmatprep.subr.mxu0 0.0
          %706 = vmatpush1.msra.mxu0 0.0
          %707 = vmatprep.subr.mxu0 0.0
          %708 = vmatpush1.msra.mxu0 0.0
          %709 = vmatprep.subr.mxu0 0.0
          %710 = vmatpush1.msra.mxu0 0.0
          %711 = vmatprep.subr.mxu0 0.0
          %712 = vmatpush1.msra.mxu0 0.0
          %713 = vmatprep.subr.mxu0 0.0
          %714 = vmatpush1.msra.mxu0 0.0
          %715 = vmatprep.subr.mxu0 0.0
          %716 = vmatpush1.msra.mxu0 0.0
          %717 = vmatprep.mubr.f32.mxu0 0.0
          %718 = vmatmul.mubr.f32.gmra.mrb[0].mxu0 %v651
          %v719 = vpop.f32.mrb[0].mxu0
          %v720 = vadd.f32 %v647, %v719
          %v721 = vpop.f32.mrb[0].mxu0
          %722 = vdwg.mxu0
          %v723 = vld [vmem:[%s442] sm:$0xff]
          %v724 = vld [vmem:[%s7] sm:$0xf]
          %726 = vset.pattern.permute.xlu0 0
          %727 = vperm.xlu0 %726, %v723
          %v728 = vpop.permute.xlu0 %727
          %v730 = vlaneseq
          %v731 = vshrl.u32 %v730, 7
          %v732 = vsub.s32 0, %v731
          %v733 = vrot.slane %v724, %v732
          %v734 = vmul.f32 %v728, %v733
          %v735 = vadd.f32 %v720, %v734
          %736 = vset.pattern.permute.xlu0 1
          %737 = vperm.xlu0 %736, %v723
          %v738 = vpop.permute.xlu0 %737
          %v740 = vlaneseq
          %v741 = vshrl.u32 %v740, 7
          %v742 = vsub.s32 1, %v741
          %v743 = vrot.slane %v724, %v742
          %v744 = vmul.f32 %v738, %v743
          %v745 = vadd.f32 %v735, %v744
          %746 = vset.pattern.permute.xlu0 2
          %747 = vperm.xlu0 %746, %v723
          %v748 = vpop.permute.xlu0 %747
          %v750 = vlaneseq
          %v751 = vshrl.u32 %v750, 7
          %v752 = vsub.s32 2, %v751
          %v753 = vrot.slane %v724, %v752
          %v754 = vmul.f32 %v748, %v753
          %v755 = vadd.f32 %v745, %v754
          %756 = vset.pattern.permute.xlu0 3
          %757 = vperm.xlu0 %756, %v723
          %v758 = vpop.permute.xlu0 %757
          %v760 = vlaneseq
          %v761 = vshrl.u32 %v760, 7
          %v762 = vsub.s32 3, %v761
          %v763 = vrot.slane %v724, %v762
          %v764 = vmul.f32 %v758, %v763
          %v765 = vadd.f32 %v755, %v764
          %v766 = vmax.f32 %v765, 0.0
          %v767 = vld [vmem:[%s9] sm:$0x1]
          %v769 = vlaneseq
          %v770 = vshrl.u32 %v769, 7
          %v771 = vsub.s32 0, %v770
          %v772 = vrot.slane %v767, %v771
          %v774 = vmul.f32 %v766, %v772
          %vm775 = vcmask 261120
          %v776 = vsel %vm775, %v774, 0.0
          %777 = vadd.xlane.f32.xlu0 %v776
          %v778 = vpop.xlane.xlu0 %777
          %v779 = vld [vmem:[#allocation8] sm:$0x1]
          %v781 = vlaneseq
          %v782 = vshrl.u32 %v781, 7
          %v783 = vsub.s32 0, %v782
          %v784 = vrot.slane %v779, %v783
          %v786 = vadd.f32 %v778, %v784
          %788 = vset.pattern.permute.xlu0 0
          %789 = vperm.xlu0 %788, %v786
          %v790 = vpop.permute.xlu0 %789
          %792 = vst [vmem:[%s428] sm:$0xff] %v790
        $region84: #{tpu_custom_call.1} parent=63 // pred_fallthru
          _
        %s793 = sand.u32 %s300, 1
        %s794 = scalar_lea.sflag [#allocation10], %s793
        %s795 = sand.u32 %s300, 1
        %s796 = smul.addr %s795, 8
        %s797 = scalar_lea.vmem [#allocation9], %s796
        // Predicated region
        $region89: #{tpu_custom_call.1} parent=63 // pred_check
          %p798 = pneg %p310
        $region90: #{tpu_custom_call.1} parent=63 // pred_check_branch
          %800 = sbr.rel (%p798) target = $region92
        $region91: #{tpu_custom_call.1} parent=63 // pred_region
          %p801 = scmp.eq.s32.totalorder %s31, 2
          %s802 = scalar_select %p801, %s32, 0
          %s804 = ssub.s32 128, 128
          %805 = vsyncadd %s794, %s804
          %s806 = smul.addr %s802, 128
          %s807 = scalar_lea.hbm %s11, %s806
          %s809 = sshll.u32 %s797, 4
          %s810 = int_to_ptr.vmem [resolvable:$true] %s809
          %812 = dma.vmem_to_hbm [thread:$0]  %s810, 128, %s807, %s794
        $region92: #{tpu_custom_call.1} parent=63 // pred_fallthru
          _
      $region64: #{tpu_custom_call.1} parent=5 // pred_fallthru
        _
      %p813 = scmp.le.s32.totalorder 2, %s22
      // Predicated region
      $region93: #{tpu_custom_call.1} parent=5 // pred_check
        %p814 = pneg %p813
      $region94: #{tpu_custom_call.1} parent=5 // pred_check_branch
        %816 = sbr.rel (%p814) target = $region96
      $region95: #{tpu_custom_call.1} parent=5 // pred_region
        %s817 = ssub.s32 %s22, 2
        // Predicated region
        $region97: #{tpu_custom_call.1} parent=95 // pred_check
          %p818 = pneg %p316
        $region98: #{tpu_custom_call.1} parent=95 // pred_check_branch
          %820 = sbr.rel (%p818) target = $region100
        $region99: #{tpu_custom_call.1} parent=95 // pred_region
          %s821 = sand.u32 %s301, 1
          %s822 = scalar_lea.sflag [#allocation10], %s821
          %s823 = sand.u32 %s301, 1
          %s824 = smul.addr %s823, 8
          %s825 = scalar_lea.vmem [#allocation9], %s824
          %826 = dma.done %s822, 128
        $region100: #{tpu_custom_call.1} parent=95 // pred_fallthru
          _
      $region96: #{tpu_custom_call.1} parent=5 // pred_fallthru
        _
    $region6: #{tpu_custom_call.1} parent=1 // loop_footer
      %s26 = sadd.s32 1, %s22
    $region7: #{tpu_custom_call.1} parent=1 // loop_footer_branch
      %21 = sbr.rel target = $region3
    $region8: #{tpu_custom_call.1} parent=1 // loop_exit
      _
    %827 = vsyncpa [#allocation10], 1
    %s828 = scalar_lea.sflag [#allocation10], 1
    %829 = vsyncpa %s828, 1

</llo_original>
